<compile_context>
chip_gen: v5e
topology: v5e:2x2
jax: 0.10.0
libtpu: 0.0.40
codegen_flags: <defaults>
</compile_context>

<pallas_src>
import functools

import jax
import jax.numpy as jnp
from jax.experimental import pallas as pl
from jax.experimental.pallas import tpu as pltpu


def _cdiv(a, b):
    return -(-a // b)


def _round_up(x, m):
    return ((x + m - 1) // m) * m


# Largest d_in handled as a single contraction block (no K tiling, no x pad).
_K_SINGLE_BLOCK_MAX = 2048


# ----------------------------------------------------------------------------
# Kernels
# ----------------------------------------------------------------------------
def _maxout_kernel_fused(x_ref, w_ref, b_ref, o_ref, *, pool_size, tn,
                         compute_dtype):
    """n_k == 1 path: one wide MXU dot per (batch, N) tile, no scratch."""
    # Cast to the MXU compute dtype in-kernel (saves a separate HBM pass on x).
    y = jnp.dot(x_ref[...].astype(compute_dtype), w_ref[...],
                preferred_element_type=jnp.float32)
    y = y + b_ref[...]                       # single fp32 broadcast bias add
    # Maxout over pool members via static, 128-aligned lane slices (VPU work).
    m = y[:, :tn]
    for p in range(1, pool_size):
        m = jnp.maximum(m, y[:, p * tn:(p + 1) * tn])
    o_ref[...] = m.astype(o_ref.dtype)


def _maxout_kernel_ktiled(x_ref, w_ref, b_ref, o_ref, acc_ref, *, pool_size,
                          tn, compute_dtype):
    """n_k > 1 path: accumulate partial contractions in fp32 VMEM scratch."""
    k = pl.program_id(2)

    @pl.when(k == 0)
    def _():
        acc_ref[...] = jnp.zeros_like(acc_ref)

    acc_ref[...] += jnp.dot(x_ref[...].astype(compute_dtype), w_ref[...],
                            preferred_element_type=jnp.float32)

    # Bias add + maxout are only valid once the full contraction is done.
    @pl.when(k == pl.num_programs(2) - 1)
    def _():
        y = acc_ref[...] + b_ref[...]
        m = y[:, :tn]
        for p in range(1, pool_size):
            m = jnp.maximum(m, y[:, p * tn:(p + 1) * tn])
        o_ref[...] = m.astype(o_ref.dtype)


# ----------------------------------------------------------------------------
# One-time parameter packing (hoist out of the per-step path)
# ----------------------------------------------------------------------------
def pack_maxout_params(weights, biases, *, compute_dtype=jnp.bfloat16,
                       tn=None, tk=None, weight_block_budget_bytes=4 << 20):
    """
    weights: [pool_size, d_in, d_out]  (transposed vs torch Linear's (out,in))
    biases:  [pool_size, d_out]
    compute_dtype: MXU input dtype; use jnp.float32 for bitwise-closer numerics.

    Packs weights output-tile-major as (d_in_p, n_ot * pool * tn) so each grid
    point's dot is (tm, tk) @ (tk, pool*tn) with all pool members of one output
    tile adjacent in N, and biases as (1, n_ot * pool * tn) in fp32.
    """
    pool_size, d_in, d_out = weights.shape
    assert biases.shape == (pool_size, d_out)
    itemsize = jnp.dtype(compute_dtype).itemsize

    # --- contraction (K) tiling --------------------------------------------
    if tk is None:
        tk = d_in if d_in <= _K_SINGLE_BLOCK_MAX else 512
    if tk >= d_in:
        tk = d_in                      # single full-extent K block, no padding
    else:
        tk = _round_up(tk, 128)        # partial K blocks must be lane-aligned
    d_in_p = _round_up(d_in, tk)
    n_k = d_in_p // tk

    # --- output (N) tiling --------------------------------------------------
    if tn is None:
        max_tn = max(128, (weight_block_budget_bytes //
                           max(1, tk * pool_size * itemsize)) // 128 * 128)
        tn = min(_round_up(d_out, 128), max_tn)
    tn = _round_up(int(tn), 128)
    d_out_p = _round_up(d_out, tn)
    n_ot = d_out_p // tn
    n_fused = n_ot * pool_size * tn

    # --- pack arrays (done once; zero padding keeps padded outputs at 0) ----
    w = jnp.pad(weights.astype(jnp.float32),
                ((0, 0), (0, d_in_p - d_in), (0, d_out_p - d_out)))
    w = w.reshape(pool_size, d_in_p, n_ot, tn)
    w = jnp.transpose(w, (1, 2, 0, 3))            # (d_in_p, n_ot, pool, tn)
    w_cat = w.reshape(d_in_p, n_fused).astype(compute_dtype)

    b = jnp.pad(biases.astype(jnp.float32), ((0, 0), (0, d_out_p - d_out)))
    b = b.reshape(pool_size, n_ot, tn)
    b_cat = jnp.transpose(b, (1, 0, 2)).reshape(1, n_fused)

    return dict(w=w_cat, b=b_cat, pool_size=pool_size, d_in=d_in, d_out=d_out,
                d_in_p=d_in_p, d_out_p=d_out_p, tk=tk, tn=tn, n_k=n_k,
                n_ot=n_ot, compute_dtype=compute_dtype)


# ----------------------------------------------------------------------------
# Steady-state apply
# ----------------------------------------------------------------------------
def maxout_base_linear2_apply(x, params, *, tm=None, out_dtype=None,
                              vmem_limit_bytes=None):
    """x: [..., d_in]  ->  [..., d_out] in out_dtype (default x.dtype)."""
    p = params
    pool_size, tn, tk = p["pool_size"], p["tn"], p["tk"]
    n_ot, n_k = p["n_ot"], p["n_k"]
    d_in, d_out = p["d_in"], p["d_out"]
    d_in_p, d_out_p = p["d_in_p"], p["d_out_p"]
    compute_dtype = p["compute_dtype"]
    n_fused_blk = pool_size * tn

    orig_shape = x.shape
    assert orig_shape[-1] == d_in
    if x.ndim != 2:
        x = x.reshape(-1, d_in)
    B = x.shape[0]
    out_dtype = x.dtype if out_dtype is None else out_dtype

    # Right-size the batch tile: aim for >= 4 pipelined grid steps (prefer
    # MXU-height-friendly 128-multiples once batches are large).
    if tm is None:
        tm = _round_up(_cdiv(B, 4), 16)
        if tm > 128:
            tm = _round_up(tm, 128)
        tm = min(tm, 512)
    tm = max(8, _round_up(int(tm), 8))
    n_bt = _cdiv(B, tm)      # trailing partial batch block handled by Pallas

    # Only the K-tiled path needs an explicitly zero-padded d_in (partial K
    # blocks would otherwise read undefined data into the contraction).
    x_in = x if d_in_p == d_in else jnp.pad(x, ((0, 0), (0, d_in_p - d_in)))

    grid = (n_bt, n_ot, n_k)

    x_spec = pl.BlockSpec((tm, tk), lambda i, j, k: (i, k))
    # Constant-index blocks are single-buffered: the second pipeline buffer is
    # pure VMEM waste for operands that are never re-fetched.
    if n_ot == 1 and n_k == 1:
        w_spec = pl.BlockSpec((tk, n_fused_blk), lambda i, j, k: (k, j),
                              pipeline_mode=pl.Buffered(1))
    else:
        w_spec = pl.BlockSpec((tk, n_fused_blk), lambda i, j, k: (k, j))
    if n_ot == 1:
        b_spec = pl.BlockSpec((1, n_fused_blk), lambda i, j, k: (0, j),
                              pipeline_mode=pl.Buffered(1))
    else:
        b_spec = pl.BlockSpec((1, n_fused_blk), lambda i, j, k: (0, j))
    o_spec = pl.BlockSpec((tm, tn), lambda i, j, k: (i, j))

    if n_k == 1:
        kernel = functools.partial(_maxout_kernel_fused, pool_size=pool_size,
                                   tn=tn, compute_dtype=compute_dtype)
        scratch_shapes = ()
    else:
        kernel = functools.partial(_maxout_kernel_ktiled, pool_size=pool_size,
                                   tn=tn, compute_dtype=compute_dtype)
        scratch_shapes = (pltpu.VMEM((tm, n_fused_blk), jnp.float32),)

    # --- VMEM budget / cost hints -------------------------------------------
    c_item = jnp.dtype(compute_dtype).itemsize
    x_item = jnp.dtype(x_in.dtype).itemsize
    o_item = jnp.dtype(out_dtype).itemsize
    w_bufs = 1 if (n_ot == 1 and n_k == 1) else 2
    b_bufs = 1 if n_ot == 1 else 2
    vmem_need = (2 * tm * tk * x_item + w_bufs * tk * n_fused_blk * c_item +
                 b_bufs * n_fused_blk * 4 + 2 * tm * tn * o_item +
                 (0 if n_k == 1 else tm * n_fused_blk * 4))
    if vmem_limit_bytes is None and vmem_need > (12 << 20):
        # v5e's scoped default is only 16 MiB; raise it explicitly when the
        # working set is large (cap at v7x's 64 MiB physical per-core VMEM).
        vmem_limit_bytes = int(min(vmem_need * 5 // 4 + (2 << 20), 64 << 20))

    cost = pl.CostEstimate(
        flops=2 * B * d_in_p * n_ot * n_fused_blk,
        transcendentals=0,
        bytes_accessed=(x_in.size * x_item + p["w"].size * c_item +
                        p["b"].size * 4 + B * d_out_p * o_item),
    )

    out_p = pl.pallas_call(
        kernel,
        out_shape=jax.ShapeDtypeStruct((B, d_out_p), out_dtype),
        grid_spec=pltpu.PrefetchScalarGridSpec(
            num_scalar_prefetch=0,
            grid=grid,
            in_specs=[x_spec, w_spec, b_spec],
            out_specs=o_spec,
            scratch_shapes=scratch_shapes,
        ),
        compiler_params=pltpu.CompilerParams(
            # batch and N tiles shard across TensorCores; K is the reduction.
            dimension_semantics=("parallel", "parallel", "arbitrary"),
            vmem_limit_bytes=vmem_limit_bytes,
        ),
        cost_estimate=cost,
    )(x_in, p["w"], p["b"])

    out = out_p if d_out_p == d_out else out_p[:, :d_out]
    if len(orig_shape) != 2:
        out = out.reshape(*orig_shape[:-1], d_out)
    return out


def maxout_base_linear2(x, weights, biases, **kwargs):
    """One-shot convenience wrapper. NOTE: re-packs weights on every call;
    for steady-state use call pack_maxout_params once and reuse the result."""
    pack_kwargs = {k: kwargs.pop(k) for k in ("compute_dtype", "tn", "tk")
                   if k in kwargs}
    params = pack_maxout_params(weights, biases, **pack_kwargs)
    return maxout_base_linear2_apply(x, params, **kwargs)


# ----------------------------------------------------------------------------
# Demo / self-test
# ----------------------------------------------------------------------------
def _torch_linear_init(key, d_in, d_out, pool_size, dtype=jnp.float32):
    """Deterministic init mimicking nn.Linear's U(-1/sqrt(d_in), 1/sqrt(d_in))."""
    bound = 1.0 / float(jnp.sqrt(jnp.array(d_in, dtype=jnp.float32)))
    kw, kb = jax.random.split(key)
    # torch Linear weight is (d_out, d_in); we store the transpose (d_in, d_out)
    w = jax.random.uniform(kw, (pool_size, d_in, d_out), dtype=dtype,
                           minval=-bound, maxval=bound)
    b = jax.random.uniform(kb, (pool_size, d_out), dtype=dtype,
                           minval=-bound, maxval=bound)
    return w, b


def _ref_maxout(x, w, b):
    # fp32 reference on the same bf16-rounded operands the MXU consumes.
    xr = x.astype(jnp.bfloat16).astype(jnp.float32)
    wr = w.astype(jnp.bfloat16).astype(jnp.float32)
    return jnp.max(jnp.einsum("bi,pio->pbo", xr, wr) + b[:, None, :], axis=0)


if __name__ == "__main__":
    key = jax.random.PRNGKey(0)
    k1, k2, k3, k4 = jax.random.split(key, 4)

    # ---- test 1: small shapes, fused single-block path (n_ot == n_k == 1) --
    # Ragged batch / non-128 d_out exercise padding + partial-block masking;
    # auto tm -> 80 -> 4 "parallel" batch tiles.
    B, d_in, d_out, pool = 300, 48, 40, 3
    x = jax.random.normal(k1, (B, d_in), dtype=jnp.float32)
    w, b = _torch_linear_init(k2, d_in, d_out, pool)
    params = pack_maxout_params(w, b)               # pack ONCE at init time
    out = jax.block_until_ready(maxout_base_linear2_apply(x, params))
    ref = _ref_maxout(x, w, b)
    assert out.shape == (B, d_out)
    assert jnp.allclose(out, ref, atol=1e-2, rtol=1e-2), (
        float(jnp.max(jnp.abs(out - ref))))

    # ---- test 2: N-tiled + K-tiled path (n_ot > 1, n_k > 1) ----------------
    B2, d_in2, d_out2, pool2 = 100, 700, 200, 2
    x2 = jax.random.normal(k3, (B2, d_in2), dtype=jnp.float32)
    w2, b2 = _torch_linear_init(k4, d_in2, d_out2, pool2)
    params2 = pack_maxout_params(w2, b2, tn=128, tk=256)   # force tiling paths
    out2 = jax.block_until_ready(maxout_base_linear2_apply(x2, params2))
    ref2 = _ref_maxout(x2, w2, b2)
    assert out2.shape == (B2, d_out2)
    assert jnp.allclose(out2, ref2, atol=1e-2, rtol=1e-2), (
        float(jnp.max(jnp.abs(out2 - ref2))))

    print("KERNEL_OK")
</pallas_src>

<mosaic_0001>
module attributes {stable_mosaic.version = 11 : i64} {
  func.func @_maxout_kernel_fused(%arg0: i32, %arg1: i32, %arg2: i32, %arg3: memref<80x48xf32, #tpu.memory_space<vmem>>, %arg4: memref<48x384xbf16, #tpu.memory_space<vmem>>, %arg5: memref<1x384xf32, #tpu.memory_space<vmem>>, %arg6: memref<80x128xf32, #tpu.memory_space<vmem>>) attributes {dimension_semantics = [#tpu.dimension_semantics<parallel>, #tpu.dimension_semantics<parallel>, #tpu.dimension_semantics<arbitrary>], iteration_bounds = array<i64: 4, 1, 1>, scalar_prefetch = 0 : i64, scratch_operands = 0 : i64, tpu.core_type = #tpu.core_type<tc>, window_params = [{transform_indices = @transform_0, window_bounds = array<i64: 80, 48>}, {pipeline_mode = #tpu.pipeline_mode<synchronous>, transform_indices = @transform_1, window_bounds = array<i64: 48, 384>}, {pipeline_mode = #tpu.pipeline_mode<synchronous>, transform_indices = @transform_2, window_bounds = array<i64: 1, 384>}, {transform_indices = @transform_3, window_bounds = array<i64: 80, 128>}]} {
    %c0 = arith.constant 0 : index
    %c0_0 = arith.constant 0 : index
    %0 = vector.load %arg3[%c0, %c0_0] : memref<80x48xf32, #tpu.memory_space<vmem>>, vector<80x48xf32>
    %1 = arith.truncf %0 : vector<80x48xf32> to vector<80x48xbf16>
    %c0_1 = arith.constant 0 : index
    %c0_2 = arith.constant 0 : index
    %2 = vector.load %arg4[%c0_1, %c0_2] : memref<48x384xbf16, #tpu.memory_space<vmem>>, vector<48x384xbf16>
    %cst = arith.constant dense<0.000000e+00> : vector<80x384xf32>
    %3 = tpu.matmul %1, %2, %cst {dimension_numbers = #tpu.dot_dimension_numbers<[1], [0], [0], [1], [0, 0, 1, 1], [], []>} : vector<80x48xbf16>, vector<48x384xbf16>, vector<80x384xf32> -> vector<80x384xf32>
    %c0_3 = arith.constant 0 : index
    %c0_4 = arith.constant 0 : index
    %4 = vector.load %arg5[%c0_3, %c0_4] : memref<1x384xf32, #tpu.memory_space<vmem>>, vector<1x384xf32>
    %5 = vector.broadcast %4 : vector<1x384xf32> to vector<80x384xf32>
    %6 = arith.addf %3, %5 : vector<80x384xf32>
    %7 = vector.extract_strided_slice %6 {offsets = [0, 0], sizes = [80, 128], strides = [1, 1]} : vector<80x384xf32> to vector<80x128xf32>
    %8 = vector.extract_strided_slice %6 {offsets = [0, 128], sizes = [80, 128], strides = [1, 1]} : vector<80x384xf32> to vector<80x128xf32>
    %9 = arith.maximumf %7, %8 : vector<80x128xf32>
    %10 = vector.extract_strided_slice %6 {offsets = [0, 256], sizes = [80, 128], strides = [1, 1]} : vector<80x384xf32> to vector<80x128xf32>
    %11 = arith.maximumf %9, %10 : vector<80x128xf32>
    %c0_5 = arith.constant 0 : index
    %c0_6 = arith.constant 0 : index
    %12 = vector.load %arg6[%c0_5, %c0_6] : memref<80x128xf32, #tpu.memory_space<vmem>>, vector<80x128xf32>
    tpu.vector_store %arg6[%c0_5, %c0_6], %11 {strides = array<i32>} : memref<80x128xf32, #tpu.memory_space<vmem>>, vector<80x128xf32>,
    return
  }
  func.func @transform_0(%arg0: i32, %arg1: i32, %arg2: i32) -> (i32, i32) {
    %c0_i32 = arith.constant 0 : i32
    return %arg0, %arg2 : i32, i32
  }
  func.func @transform_1(%arg0: i32, %arg1: i32, %arg2: i32) -> (i32, i32) {
    %c0_i32 = arith.constant 0 : i32
    return %arg2, %arg1 : i32, i32
  }
  func.func @transform_2(%arg0: i32, %arg1: i32, %arg2: i32) -> (i32, i32) {
    %c0_i32 = arith.constant 0 : i32
    %c0_i32_0 = arith.constant 0 : i32
    return %c0_i32, %arg1 : i32, i32
  }
  func.func @transform_3(%arg0: i32, %arg1: i32, %arg2: i32) -> (i32, i32) {
    %c0_i32 = arith.constant 0 : i32
    return %arg0, %arg1 : i32, i32
  }
}

</mosaic_0001>

<llo_original>
// kernel: tpu_custom_call.1
$region0: #{tpu_custom_call.1}
  #allocation0 [shape = 'u32[]', space=smem, size = 0x4, offset = 0x4, fixed_abs, tag = 'smem constant byte address 0x4 - core index']
  #allocation1 [shape = 'u32[72,128]{1,0:T(1,128)}', space=vmem, size = 0x9000, scoped, tag = 'internal scratch']
  %s0 = inlined_call_operand.vmem [shape: f32[300,48], index: 0, kind: input, shape index: {}]
  %s1 = inlined_call_operand.vmem [shape: bf16[48,384], index: 1, kind: input, shape index: {}]
  %s2 = inlined_call_operand.vmem [shape: f32[1,384], index: 2, kind: input, shape index: {}]
  %s3 = inlined_call_operand.hbm [shape: f32[300,128], index: 3, kind: output, shape index: {}]
  %s4 = sld [smem:[#allocation0]]
  $region45: #{tpu_custom_call.1} parent=0
    _
  %s6 = ssub.s32 1, %s4
  %s7 = scalar_select 0, %s6, %s4
  $region1: #{tpu_custom_call.1} parent=0
    #allocation2 [shape = 'u8[81920]{0}', space=vmem, size = 0x14000, scoped, tag = 'output window, operand 0']
    #allocation3 [shape = 's32[2]{0}', space=sflag, size = 0x8, scoped, tag = 'scoped memory for tpu_custom_call.1']
    %8 = vsyncpa [#allocation3], 0
    %s9 = scalar_lea.sflag [#allocation3], 1
    %10 = vsyncpa %s9, 0
    loop: start=0, step=1, limit=6
    $region2: #{tpu_custom_call.1} parent=1 // loop_pre_header
      _
    $region3: #{tpu_custom_call.1} parent=1 // loop_header
      %s12 = sphi 0, %s16
      %p13 = scmp.ge.s32.totalorder %s12, 6
      %s19 = sphi 0, %s38
      %s20 = sphi 0, %s34
      %s21 = sphi 0, %s30
      %s22 = sphi 0, %s19
      %s23 = sphi 0, %s20
      %s24 = sphi 0, %s21
      %s25 = sphi 0, %s22
      %s26 = sphi 0, %s23
      %s27 = sphi 0, %s24
      %s43 = sphi 0, %s45
      %s46 = sphi 0, %s43
      %s47 = sphi 0, %s46
      %s63 = sphi 0, %s47
      %s71 = sphi 0, %s73
      %s74 = sphi 0, %s71
      %s75 = sphi 0, %s74
      %s91 = sphi 0, %s75
      %s97 = sphi 0, %s99
      %s100 = sphi 0, %s97
      %s101 = sphi 0, %s100
      %s117 = sphi 0, %s101
      %s125 = sphi 0, %s127
      %s128 = sphi 0, %s125
      %s129 = sphi 0, %s128
      %s145 = sphi 0, %s129
    $region4: #{tpu_custom_call.1} parent=1 // loop_header_branch
      %15 = sbr.rel (%p13) target = $region8
    $region5: #{tpu_custom_call.1} parent=1 // loop_body
      %s17 = ssub.s32 %s12, 1
      %s18 = ssub.s32 %s12, 2
      %s28 = sadd.s32 1, %s21
      %p29 = scmp.ge.s32.totalorder %s28, 1
      %s30 = scalar_select %p29, 0, %s28
      %s31 = sadd.s32 1, %s20
      %s32 = scalar_select %p29, %s31, %s20
      %p33 = scmp.ge.s32.totalorder %s32, 1
      %s34 = scalar_select %p33, 0, %s32
      %s35 = sadd.s32 1, %s19
      %s36 = scalar_select %p33, %s35, %s19
      %p37 = scmp.ge.s32.totalorder %s36, 4
      %s38 = scalar_select %p37, 0, %s36
      %s39 = ssub.s32 %s19, %s38
      %s40 = ssub.s32 %s21, %s30
      %s41 = sor.u32 %s39, %s40
      %p42 = scmp.eq.s32.totalorder %s41, 0
      %s44 = sadd.s32 %s43, 1
      %s45 = scalar_select %p42, %s43, %s44
      %p48 = pneg %p42
      %p49 = scmp.eq.s32.totalorder %s12, 3
      %p50 = por %p48, %p49
      %p51 = scmp.ne.s32.totalorder %s43, %s46
      %p52 = scmp.eq.s32.totalorder %s12, 0
      %p53 = por %p51, %p52
      %p54 = scmp.ne.s32.totalorder %s43, %s46
      %p55 = scmp.eq.s32.totalorder %s17, 3
      %p56 = por %p54, %p55
      %p57 = scmp.ne.s32.totalorder %s46, %s47
      %p58 = scmp.eq.s32.totalorder %s17, 0
      %p59 = por %p57, %p58
      %p60 = scmp.ne.s32.totalorder %s46, %s47
      %p61 = scmp.eq.s32.totalorder %s18, 3
      %p62 = por %p60, %p61
      %p64 = scmp.ne.s32.totalorder %s47, %s63
      %p65 = scmp.eq.s32.totalorder %s18, 0
      %p66 = por %p64, %p65
      %s67 = ssub.s32 %s21, %s30
      %s68 = ssub.s32 %s20, %s34
      %s69 = sor.u32 %s67, %s68
      %p70 = scmp.eq.s32.totalorder %s69, 0
      %s72 = sadd.s32 %s71, 1
      %s73 = scalar_select %p70, %s71, %s72
      %p76 = pneg %p70
      %p77 = scmp.eq.s32.totalorder %s12, 3
      %p78 = por %p76, %p77
      %p79 = scmp.ne.s32.totalorder %s71, %s74
      %p80 = scmp.eq.s32.totalorder %s12, 0
      %p81 = por %p79, %p80
      %p82 = scmp.ne.s32.totalorder %s71, %s74
      %p83 = scmp.eq.s32.totalorder %s17, 3
      %p84 = por %p82, %p83
      %p85 = scmp.ne.s32.totalorder %s74, %s75
      %p86 = scmp.eq.s32.totalorder %s17, 0
      %p87 = por %p85, %p86
      %p88 = scmp.ne.s32.totalorder %s74, %s75
      %p89 = scmp.eq.s32.totalorder %s18, 3
      %p90 = por %p88, %p89
      %p92 = scmp.ne.s32.totalorder %s75, %s91
      %p93 = scmp.eq.s32.totalorder %s18, 0
      %p94 = por %p92, %p93
      %s95 = ssub.s32 %s20, %s34
      %p96 = scmp.eq.s32.totalorder %s95, 0
      %s98 = sadd.s32 %s97, 1
      %s99 = scalar_select %p96, %s97, %s98
      %p102 = pneg %p96
      %p103 = scmp.eq.s32.totalorder %s12, 3
      %p104 = por %p102, %p103
      %p105 = scmp.ne.s32.totalorder %s97, %s100
      %p106 = scmp.eq.s32.totalorder %s12, 0
      %p107 = por %p105, %p106
      %p108 = scmp.ne.s32.totalorder %s97, %s100
      %p109 = scmp.eq.s32.totalorder %s17, 3
      %p110 = por %p108, %p109
      %p111 = scmp.ne.s32.totalorder %s100, %s101
      %p112 = scmp.eq.s32.totalorder %s17, 0
      %p113 = por %p111, %p112
      %p114 = scmp.ne.s32.totalorder %s100, %s101
      %p115 = scmp.eq.s32.totalorder %s18, 3
      %p116 = por %p114, %p115
      %p118 = scmp.ne.s32.totalorder %s101, %s117
      %p119 = scmp.eq.s32.totalorder %s18, 0
      %p120 = por %p118, %p119
      %s121 = ssub.s32 %s19, %s38
      %s122 = ssub.s32 %s20, %s34
      %s123 = sor.u32 %s121, %s122
      %p124 = scmp.eq.s32.totalorder %s123, 0
      %s126 = sadd.s32 %s125, 1
      %s127 = scalar_select %p124, %s125, %s126
      %p130 = pneg %p124
      %p131 = scmp.eq.s32.totalorder %s12, 3
      %p132 = por %p130, %p131
      %p133 = scmp.ne.s32.totalorder %s125, %s128
      %p134 = scmp.eq.s32.totalorder %s12, 0
      %p135 = por %p133, %p134
      %p136 = scmp.ne.s32.totalorder %s125, %s128
      %p137 = scmp.eq.s32.totalorder %s17, 3
      %p138 = por %p136, %p137
      %p139 = scmp.ne.s32.totalorder %s128, %s129
      %p140 = scmp.eq.s32.totalorder %s17, 0
      %p141 = por %p139, %p140
      %p142 = scmp.ne.s32.totalorder %s128, %s129
      %p143 = scmp.eq.s32.totalorder %s18, 3
      %p144 = por %p142, %p143
      %p146 = scmp.ne.s32.totalorder %s129, %s145
      %p147 = scmp.eq.s32.totalorder %s18, 0
      %p148 = por %p146, %p147
      %p149 = scmp.le.s32.totalorder 1, %s12
      %p150 = scmp.lt.s32.totalorder %s12, 5
      %p151 = pnand %p149, %p150
      %p152 = pneg %p151
      // Predicated region
      $region9: #{tpu_custom_call.1} parent=5 // pred_check
        _
      $region10: #{tpu_custom_call.1} parent=5 // pred_check_branch
        %154 = sbr.rel (%p151) target = $region12
      $region11: #{tpu_custom_call.1} parent=5 // pred_region
        %s155 = ssub.s32 %s12, 1
        // Predicated region
        $region13: #{tpu_custom_call.1} parent=11 // pred_check
          %p156 = pneg %p87
        $region14: #{tpu_custom_call.1} parent=11 // pred_check_branch
          %158 = sbr.rel (%p156) target = $region16
        $region15: #{tpu_custom_call.1} parent=11 // pred_region
          %s159 = smul.u32 6, %s24
          %s160 = smul.u32 3, %s23
          %p161 = scmp.lt.s32.totalorder %s159, 5
          %s162 = scalar_select %p161, %s159, 5
          %p163 = scmp.lt.s32.totalorder %s160, 2
          %s164 = scalar_select %p163, %s160, 2
          %s165 = smul.addr %s162, 3
          %s166 = sadd.s32 %s164, %s165
          %s167 = smul.addr %s166, 4
          %s168 = scalar_lea.vmem %s1, %s167
          %s169 = smul.u32 6, %s24
          %s170 = smul.u32 3, %s23
        $region16: #{tpu_custom_call.1} parent=11 // pred_fallthru
          _
        // Predicated region
        $region17: #{tpu_custom_call.1} parent=11 // pred_check
          %p171 = pneg %p113
        $region18: #{tpu_custom_call.1} parent=11 // pred_check_branch
          %173 = sbr.rel (%p171) target = $region20
        $region19: #{tpu_custom_call.1} parent=11 // pred_region
          %s174 = smul.u32 3, %s23
          %p175 = scmp.lt.s32.totalorder %s174, 2
          %s176 = scalar_select %p175, %s174, 2
          %s177 = scalar_lea.vmem %s2, %s176
          %s178 = smul.u32 3, %s23
        $region20: #{tpu_custom_call.1} parent=11 // pred_fallthru
          _
      $region12: #{tpu_custom_call.1} parent=5 // pred_fallthru
        _
      %p179 = scmp.lt.s32.totalorder %s12, 4
      // Predicated region
      $region21: #{tpu_custom_call.1} parent=5 // pred_check
        %p180 = pneg %p179
      $region22: #{tpu_custom_call.1} parent=5 // pred_check_branch
        %182 = sbr.rel (%p180) target = $region24
      $region23: #{tpu_custom_call.1} parent=5 // pred_region
        // Predicated region
        $region25: #{tpu_custom_call.1} parent=23 // pred_check
          %p183 = pneg %p53
        $region26: #{tpu_custom_call.1} parent=23 // pred_check_branch
          %185 = sbr.rel (%p183) target = $region28
        $region27: #{tpu_custom_call.1} parent=23 // pred_region
          %s186 = smul.u32 10, %s19
          %s187 = ssub.s32 38, %s186
          %p188 = scmp.lt.s32.totalorder %s187, 10
          %s189 = scalar_select %p188, %s187, 10
          %s190 = smul.u32 8, %s189
          %p191 = scmp.lt.s32.totalorder %s186, 37
          %s192 = scalar_select %p191, %s186, 37
          %p193 = scmp.lt.s32.totalorder %s21, 0
          %s194 = scalar_select %p193, %s21, 0
          %s195 = sadd.s32 %s194, %s192
          %s196 = smul.addr %s195, 8
          %s197 = scalar_lea.vmem %s0, %s196
          %s198 = smul.u32 10, %s19
          %s199 = ssub.s32 38, %s198
          %p200 = scmp.lt.s32.totalorder %s199, 10
          %s201 = scalar_select %p200, %s199, 10
          %s202 = smul.u32 8, %s201
        $region28: #{tpu_custom_call.1} parent=23 // pred_fallthru
          _
      $region24: #{tpu_custom_call.1} parent=5 // pred_fallthru
        _
      %p203 = scmp.le.s32.totalorder 1, %s12
      %p204 = scmp.lt.s32.totalorder %s12, 5
      %p205 = pnand %p203, %p204
      %p206 = pneg %p205
      // Predicated region
      $region29: #{tpu_custom_call.1} parent=5 // pred_check
        _
      $region30: #{tpu_custom_call.1} parent=5 // pred_check_branch
        %208 = sbr.rel (%p205) target = $region32
      $region31: #{tpu_custom_call.1} parent=5 // pred_region
        %s209 = ssub.s32 %s12, 1
        %s210 = smul.u32 10, %s22
        %s211 = ssub.s32 38, %s210
        %p212 = scmp.lt.s32.totalorder %s211, 10
        %s213 = scalar_select %p212, %s211, 10
        %s214 = smul.u32 8, %s213
        %p215 = scmp.lt.s32.totalorder %s210, 37
        %s216 = scalar_select %p215, %s210, 37
        %p217 = scmp.lt.s32.totalorder %s24, 0
        %s218 = scalar_select %p217, %s24, 0
        %s219 = sadd.s32 %s218, %s216
        %s220 = smul.addr %s219, 8
        %s221 = scalar_lea.vmem %s0, %s220
        %p222 = pneg %p59
        %p223 = pneg %p56
        %s224 = smul.u32 6, %s24
        %s225 = smul.u32 3, %s23
        %p226 = scmp.lt.s32.totalorder %s224, 5
        %s227 = scalar_select %p226, %s224, 5
        %p228 = scmp.lt.s32.totalorder %s225, 2
        %s229 = scalar_select %p228, %s225, 2
        %s230 = smul.addr %s227, 3
        %s231 = sadd.s32 %s229, %s230
        %s232 = smul.addr %s231, 4
        %s233 = scalar_lea.vmem %s1, %s232
        %p234 = pneg %p87
        %p235 = pneg %p84
        %s236 = smul.u32 3, %s23
        %p237 = scmp.lt.s32.totalorder %s236, 2
        %s238 = scalar_select %p237, %s236, 2
        %s239 = scalar_lea.vmem %s2, %s238
        %p240 = pneg %p113
        %p241 = pneg %p110
        %p242 = pneg %p141
        %p243 = pneg %p138
        %s244 = sand.u32 %s128, 1
        %s245 = scalar_lea.sflag [#allocation3], %s244
        %s246 = sand.u32 %s128, 1
        %s247 = smul.addr %s246, 80
        %s248 = scalar_lea.vmem [#allocation2], %s247
        %s249 = smul.u32 10, %s22
        %s250 = ssub.s32 38, %s249
        %p251 = scmp.lt.s32.totalorder %s250, 10
        %s252 = scalar_select %p251, %s250, 10
        %s253 = smul.u32 8, %s252
        %p254 = scmp.lt.s32.totalorder %s249, 37
        %s255 = scalar_select %p254, %s249, 37
        %p256 = scmp.lt.s32.totalorder %s24, 0
        %s257 = scalar_select %p256, %s24, 0
        %s258 = sadd.s32 %s257, %s255
        %s259 = smul.addr %s258, 8
        %s260 = scalar_lea.vmem %s0, %s259
        %s261 = smul.u32 10, %s22
        %s262 = ssub.s32 38, %s261
        %p263 = scmp.lt.s32.totalorder %s262, 10
        %s264 = scalar_select %p263, %s262, 10
        %s265 = smul.u32 8, %s264
        %s266 = smul.u32 6, %s24
        %s267 = smul.u32 3, %s23
        %p268 = scmp.lt.s32.totalorder %s266, 5
        %s269 = scalar_select %p268, %s266, 5
        %p270 = scmp.lt.s32.totalorder %s267, 2
        %s271 = scalar_select %p270, %s267, 2
        %s272 = smul.addr %s269, 3
        %s273 = sadd.s32 %s271, %s272
        %s274 = smul.addr %s273, 4
        %s275 = scalar_lea.vmem %s1, %s274
        %s276 = smul.u32 6, %s24
        %s277 = smul.u32 3, %s23
        %s278 = smul.u32 3, %s23
        %p279 = scmp.lt.s32.totalorder %s278, 2
        %s280 = scalar_select %p279, %s278, 2
        %s281 = scalar_lea.vmem %s2, %s280
        %s282 = smul.u32 3, %s23
        %s283 = smul.u32 10, %s22
        %s284 = ssub.s32 38, %s283
        %p285 = scmp.lt.s32.totalorder %s284, 10
        %s286 = scalar_select %p285, %s284, 10
        %s287 = smul.u32 8, %s286
        %v289 = vld [vmem:[%s260] sm:$0xff]
        %v290 = vld [vmem:[%s260 + $0x8] sm:$0xff]
        %v291 = vld [vmem:[%s260 + $0x10] sm:$0xff]
        %v292 = vld [vmem:[%s260 + $0x18] sm:$0xff]
        %v293 = vld [vmem:[%s260 + $0x20] sm:$0xff]
        %v294 = vld [vmem:[%s260 + $0x28] sm:$0xff]
        %v295 = vld [vmem:[%s260 + $0x30] sm:$0xff]
        %v296 = vld [vmem:[%s260 + $0x38] sm:$0xff]
        %v297 = vld [vmem:[%s260 + $0x40] sm:$0xff]
        %v298 = vld [vmem:[%s260 + $0x48] sm:$0xff]
        %v299 = vpack.c.bf16 %v290, %v289
        %v300 = vpack.c.bf16 %v292, %v291
        %v301 = vpack.c.bf16 %v294, %v293
        %v302 = vpack.c.bf16 %v296, %v295
        %v303 = vpack.c.bf16 %v298, %v297
        %v304 = vld [vmem:[%s275] sm:$0xff]
        %v305 = vld [vmem:[%s275 + $0x8] sm:$0xf]
        %v306 = vld [vmem:[%s275 + $0xc] sm:$0xff]
        %v307 = vld [vmem:[%s275 + $0x14] sm:$0xf]
        %v308 = vld [vmem:[%s275 + $0x18] sm:$0xff]
        %v309 = vld [vmem:[%s275 + $0x20] sm:$0xf]
        %v310 = vld [vmem:[%s275 + $0x24] sm:$0xff]
        %v311 = vld [vmem:[%s275 + $0x2c] sm:$0xf]
        %v312 = vld [vmem:[%s275 + $0x30] sm:$0xff]
        %v313 = vld [vmem:[%s275 + $0x38] sm:$0xf]
        %v314 = vld [vmem:[%s275 + $0x3c] sm:$0xff]
        %v315 = vld [vmem:[%s275 + $0x44] sm:$0xf]
        %v316 = vld [vmem:[%s281] sm:$0x7]
        %v318 = vperm.slane %v316, 0
        %v319 = vperm.slane %v316, 1
        %v320 = vperm.slane %v316, 2
        %v336 = vunpack.c.l.b16 %v304
        %v337 = vunpack.c.h.b16 %v304
        %v338 = vunpack.c.l.b16 %v305
        %v339 = vunpack.c.l.b16 %v306
        %v340 = vunpack.c.h.b16 %v306
        %v341 = vunpack.c.l.b16 %v307
        %v342 = vunpack.c.l.b16 %v308
        %v343 = vunpack.c.h.b16 %v308
        %v344 = vunpack.c.l.b16 %v309
        %v345 = vunpack.c.l.b16 %v310
        %v346 = vunpack.c.h.b16 %v310
        %v347 = vunpack.c.l.b16 %v311
        %v348 = vunpack.c.l.b16 %v312
        %v349 = vunpack.c.h.b16 %v312
        %v350 = vunpack.c.l.b16 %v313
        %v351 = vunpack.c.l.b16 %v314
        %v352 = vunpack.c.h.b16 %v314
        %v353 = vunpack.c.l.b16 %v315
        %v354 = vpack.c.b16 %v339, %v336
        %v355 = vpack.c.b16 %v340, %v337
        %v356 = vpack.c.b16 %v341, %v338
        %v357 = vpack.c.b16 %v345, %v342
        %v358 = vpack.c.b16 %v346, %v343
        %v359 = vpack.c.b16 %v347, %v344
        %v360 = vpack.c.b16 %v351, %v348
        %v361 = vpack.c.b16 %v352, %v349
        %v362 = vpack.c.b16 %v353, %v350
        %vm372 = vcmask 392192
        %v374 = vsel %vm372, %v299, 0
        %v377 = vsel %vm372, %v300, 0
        %v380 = vsel %vm372, %v301, 0
        %v383 = vsel %vm372, %v302, 0
        %v386 = vsel %vm372, %v303, 0
        %388 = vmatpush.bf16.msra.mxu0 0
        %389 = vmatpush.bf16.msra.mxu0 0
        %390 = vmatpush.bf16.msra.mxu0 0
        %391 = vmatpush.bf16.msra.mxu0 0
        %392 = vmatpush.bf16.msra.mxu0 0
        %393 = vmatpush.bf16.msra.mxu0 %v360
        %394 = vmatpush.bf16.msra.mxu0 %v357
        %395 = vmatpush.bf16.msra.mxu0 %v354
        %396 = vmatmul.bf16.gmra.mxu0 %v374
        %v397 = vpop.f32.mrf.mxu0
        %v398 = vadd.f32 %v318, %v397
        %v399 = vpop.f32.mrf.mxu0
        %v400 = vadd.f32 %v318, %v399
        %401 = vmatmul.bf16.gmra.mxu0 %v377
        %v402 = vpop.f32.mrf.mxu0
        %v403 = vadd.f32 %v318, %v402
        %v404 = vpop.f32.mrf.mxu0
        %v405 = vadd.f32 %v318, %v404
        %406 = vmatmul.bf16.gmra.mxu0 %v380
        %v407 = vpop.f32.mrf.mxu0
        %v408 = vadd.f32 %v318, %v407
        %v409 = vpop.f32.mrf.mxu0
        %v410 = vadd.f32 %v318, %v409
        %411 = vmatmul.bf16.gmra.mxu0 %v383
        %v412 = vpop.f32.mrf.mxu0
        %v413 = vadd.f32 %v318, %v412
        %v414 = vpop.f32.mrf.mxu0
        %v415 = vadd.f32 %v318, %v414
        %416 = vmatmul.bf16.gmra.mxu0 %v386
        %v417 = vpop.f32.mrf.mxu0
        %v418 = vadd.f32 %v318, %v417
        %v419 = vpop.f32.mrf.mxu0
        %v420 = vadd.f32 %v318, %v419
        %421 = vdwg.mxu0
        %422 = vmatpush.bf16.msra.mxu0 0
        %423 = vmatpush.bf16.msra.mxu0 0
        %424 = vmatpush.bf16.msra.mxu0 0
        %425 = vmatpush.bf16.msra.mxu0 0
        %426 = vmatpush.bf16.msra.mxu0 0
        %427 = vmatpush.bf16.msra.mxu0 %v361
        %428 = vmatpush.bf16.msra.mxu0 %v358
        %429 = vmatpush.bf16.msra.mxu0 %v355
        %430 = vmatmul.bf16.gmra.mxu0 %v374
        %v431 = vpop.f32.mrf.mxu0
        %v432 = vadd.f32 %v319, %v431
        %v433 = vpop.f32.mrf.mxu0
        %v434 = vadd.f32 %v319, %v433
        %435 = vmatmul.bf16.gmra.mxu0 %v377
        %v436 = vpop.f32.mrf.mxu0
        %v437 = vadd.f32 %v319, %v436
        %v438 = vpop.f32.mrf.mxu0
        %v439 = vadd.f32 %v319, %v438
        %440 = vmatmul.bf16.gmra.mxu0 %v380
        %v441 = vpop.f32.mrf.mxu0
        %v442 = vadd.f32 %v319, %v441
        %v443 = vpop.f32.mrf.mxu0
        %v444 = vadd.f32 %v319, %v443
        %445 = vmatmul.bf16.gmra.mxu0 %v383
        %v446 = vpop.f32.mrf.mxu0
        %v447 = vadd.f32 %v319, %v446
        %v448 = vpop.f32.mrf.mxu0
        %v449 = vadd.f32 %v319, %v448
        %450 = vmatmul.bf16.gmra.mxu0 %v386
        %v451 = vpop.f32.mrf.mxu0
        %v452 = vadd.f32 %v319, %v451
        %v453 = vpop.f32.mrf.mxu0
        %v454 = vadd.f32 %v319, %v453
        %455 = vdwg.mxu0
        %456 = vmatpush.bf16.msra.mxu0 0
        %457 = vmatpush.bf16.msra.mxu0 0
        %458 = vmatpush.bf16.msra.mxu0 0
        %459 = vmatpush.bf16.msra.mxu0 0
        %460 = vmatpush.bf16.msra.mxu0 0
        %461 = vmatpush.bf16.msra.mxu0 %v362
        %462 = vmatpush.bf16.msra.mxu0 %v359
        %463 = vmatpush.bf16.msra.mxu0 %v356
        %464 = vmatmul.bf16.gmra.mxu0 %v374
        %v465 = vpop.f32.mrf.mxu0
        %v466 = vadd.f32 %v320, %v465
        %v467 = vpop.f32.mrf.mxu0
        %v468 = vadd.f32 %v320, %v467
        %469 = vmatmul.bf16.gmra.mxu0 %v377
        %v470 = vpop.f32.mrf.mxu0
        %v471 = vadd.f32 %v320, %v470
        %v472 = vpop.f32.mrf.mxu0
        %v473 = vadd.f32 %v320, %v472
        %474 = vmatmul.bf16.gmra.mxu0 %v380
        %v475 = vpop.f32.mrf.mxu0
        %v476 = vadd.f32 %v320, %v475
        %v477 = vpop.f32.mrf.mxu0
        %v478 = vadd.f32 %v320, %v477
        %479 = vmatmul.bf16.gmra.mxu0 %v383
        %v480 = vpop.f32.mrf.mxu0
        %v481 = vadd.f32 %v320, %v480
        %v482 = vpop.f32.mrf.mxu0
        %v483 = vadd.f32 %v320, %v482
        %484 = vmatmul.bf16.gmra.mxu0 %v386
        %v485 = vpop.f32.mrf.mxu0
        %v486 = vadd.f32 %v320, %v485
        %v487 = vpop.f32.mrf.mxu0
        %v488 = vadd.f32 %v320, %v487
        %489 = vdwg.mxu0
        %v490 = vmax.f32 %v398, %v432
        %v491 = vmax.f32 %v400, %v434
        %v492 = vmax.f32 %v403, %v437
        %v493 = vmax.f32 %v405, %v439
        %v494 = vmax.f32 %v408, %v442
        %v495 = vmax.f32 %v410, %v444
        %v496 = vmax.f32 %v413, %v447
        %v497 = vmax.f32 %v415, %v449
        %v498 = vmax.f32 %v418, %v452
        %v499 = vmax.f32 %v420, %v454
        %v500 = vmax.f32 %v490, %v466
        %v501 = vmax.f32 %v491, %v468
        %v502 = vmax.f32 %v492, %v471
        %v503 = vmax.f32 %v493, %v473
        %v504 = vmax.f32 %v494, %v476
        %v505 = vmax.f32 %v495, %v478
        %v506 = vmax.f32 %v496, %v481
        %v507 = vmax.f32 %v497, %v483
        %v508 = vmax.f32 %v498, %v486
        %v509 = vmax.f32 %v499, %v488
        %510 = vst [vmem:[%s248] sm:$0xff] %v500
        %511 = vst [vmem:[%s248 + $0x8] sm:$0xff] %v501
        %512 = vst [vmem:[%s248 + $0x10] sm:$0xff] %v502
        %513 = vst [vmem:[%s248 + $0x18] sm:$0xff] %v503
        %514 = vst [vmem:[%s248 + $0x20] sm:$0xff] %v504
        %515 = vst [vmem:[%s248 + $0x28] sm:$0xff] %v505
        %516 = vst [vmem:[%s248 + $0x30] sm:$0xff] %v506
        %517 = vst [vmem:[%s248 + $0x38] sm:$0xff] %v507
        %518 = vst [vmem:[%s248 + $0x40] sm:$0xff] %v508
        %519 = vst [vmem:[%s248 + $0x48] sm:$0xff] %v509
        %s520 = sand.u32 %s128, 1
        %s521 = scalar_lea.sflag [#allocation3], %s520
        %s522 = sand.u32 %s128, 1
        %s523 = smul.addr %s522, 80
        %s524 = scalar_lea.vmem [#allocation2], %s523
        // Predicated region
        $region33: #{tpu_custom_call.1} parent=31 // pred_check
          %p525 = pneg %p138
        $region34: #{tpu_custom_call.1} parent=31 // pred_check_branch
          %527 = sbr.rel (%p525) target = $region36
        $region35: #{tpu_custom_call.1} parent=31 // pred_region
          %s528 = smul.u32 10, %s22
          %s529 = ssub.s32 38, %s528
          %p530 = scmp.lt.s32.totalorder %s529, 10
          %s531 = scalar_select %p530, %s529, 10
          %s532 = smul.u32 8, %s531
          %s533 = ssub.s32 80, %s532
          %s534 = sshll.u32 %s533, 4
          %535 = vsyncadd %s521, %s534
          %p536 = scmp.ne.s32.totalorder 0, %s532
          %s537 = sadd.s32 %s23, %s528
          %s538 = smul.addr %s537, 8
          %s539 = scalar_lea.hbm %s3, %s538
          %s540 = smul.u32 8, %s531
          %s541 = sshll.u32 %s524, 4
          %s542 = int_to_ptr.vmem [resolvable:$true] %s541
          %s543 = sshll.u32 %s539, 4
          %s544 = int_to_ptr.hbm [resolvable:$true] %s543
          %s545 = sshll.u32 %s540, 4
          %549 = dma.vmem_to_hbm [thread:$0]  (%p536), %s542, %s545, %s544, %s521, 128, 128, 8
        $region36: #{tpu_custom_call.1} parent=31 // pred_fallthru
          _
      $region32: #{tpu_custom_call.1} parent=5 // pred_fallthru
        _
      %p550 = scmp.le.s32.totalorder 2, %s12
      // Predicated region
      $region37: #{tpu_custom_call.1} parent=5 // pred_check
        %p551 = pneg %p550
      $region38: #{tpu_custom_call.1} parent=5 // pred_check_branch
        %553 = sbr.rel (%p551) target = $region40
      $region39: #{tpu_custom_call.1} parent=5 // pred_region
        %s554 = ssub.s32 %s12, 2
        // Predicated region
        $region41: #{tpu_custom_call.1} parent=39 // pred_check
          %p555 = pneg %p144
        $region42: #{tpu_custom_call.1} parent=39 // pred_check_branch
          %557 = sbr.rel (%p555) target = $region44
        $region43: #{tpu_custom_call.1} parent=39 // pred_region
          %s558 = sand.u32 %s129, 1
          %s559 = scalar_lea.sflag [#allocation3], %s558
          %s560 = sand.u32 %s129, 1
          %s561 = smul.addr %s560, 80
          %s562 = scalar_lea.vmem [#allocation2], %s561
          %564 = dma.done %s559, 1280
        $region44: #{tpu_custom_call.1} parent=39 // pred_fallthru
          _
      $region40: #{tpu_custom_call.1} parent=5 // pred_fallthru
        _
    $region6: #{tpu_custom_call.1} parent=1 // loop_footer
      %s16 = sadd.s32 1, %s12
    $region7: #{tpu_custom_call.1} parent=1 // loop_footer_branch
      %11 = sbr.rel target = $region3
    $region8: #{tpu_custom_call.1} parent=1 // loop_exit
      _
    %565 = vsyncpa [#allocation3], 1
    %s566 = scalar_lea.sflag [#allocation3], 1
    %567 = vsyncpa %s566, 1

</llo_original>
